<compile_context>
chip_gen: v7x
topology: tpu7x:2x2x1
jax: 0.10.0
libtpu: 0.0.40
codegen_flags: <defaults>
</compile_context>

<pallas_src>
import jax
import jax.numpy as jnp
from jax.experimental import pallas as pl
from jax.experimental.pallas import tpu as pltpu

LANE = 128
SUBLANE = 8

# Per-grid-step budget for the double-buffered pipelined blocks
# (x1, x2, out, gt -> (3*C + GC) elements per spatial point, 2 buffers each).
_VMEM_BLOCK_BUDGET = 24 * 1024 * 1024
# Scoped VMEM limit: leaves headroom on v7x (64 MiB physical); v5e/v6e have more.
_VMEM_LIMIT = 48 * 1024 * 1024


def _merge_kernel(w_ref, x1_ref, x2_ref, gt_ref, o_ref):
    # x1 + x2 + sigmoid(gt) * x2 * w  ==  x1 + x2 * (1 + w * sigmoid(gt))
    w = w_ref[0]                                                # f32 scalar (SMEM)
    gate = jax.nn.sigmoid(gt_ref[...].astype(jnp.float32))      # EUP, f32 gate
    scale = (1.0 + w * gate).astype(x2_ref.dtype)               # broadcasts over C if GC==1
    o_ref[...] = x1_ref[...] + x2_ref[...] * scale              # native-dtype VPU math


def _pick_rows(S, c, gc, itemsize):
    """Largest sublane-multiple tile of the (S, 128) layout within VMEM budget."""
    per_row_bytes = (3 * c + gc) * LANE * itemsize * 2          # 2x double-buffering
    rows = max(int(_VMEM_BLOCK_BUDGET // per_row_bytes), SUBLANE)
    rows = (rows // SUBLANE) * SUBLANE
    if rows >= S:
        return S                                                # full dim: always legal
    return max(rows, SUBLANE)


def _pick_cols(HW, c, gc, itemsize):
    """Largest lane-multiple tile of the flat (HW,) layout within VMEM budget."""
    per_col_bytes = (3 * c + gc) * itemsize * 2
    cols = max(int(_VMEM_BLOCK_BUDGET // per_col_bytes), LANE)
    cols = (cols // LANE) * LANE
    if cols >= HW:
        return HW                                               # full dim: always legal
    return max(cols, LANE)


def merge_pallas(x1, x2, gt_pre, w):
    """Merge.forward: x1 + x2 + sigmoid(gt_pre) * x2 * w.

    x1, x2:  (B, C, H, W)
    gt_pre:  (B, 1, H, W) or (B, C, H, W)
    w:       python/JAX scalar
    """
    assert x1.shape == x2.shape, "x1 and x2 must have identical shapes"
    assert x1.dtype == x2.dtype, "x1 and x2 must have identical dtypes"
    B, C, H, W = x1.shape
    GB, GC, GH, GW = gt_pre.shape
    assert GB == B and GH == H and GW == W and GC in (1, C), "gt_pre not broadcastable"

    dtype = x1.dtype
    itemsize = jnp.dtype(dtype).itemsize
    HW = H * W
    w_arr = jnp.asarray(w, dtype=jnp.float32).reshape(1)

    cost = pl.CostEstimate(
        flops=4 * B * C * HW,
        transcendentals=B * GC * HW,
        bytes_accessed=(3 * C + GC) * B * HW * itemsize,
    )
    # NOTE(v7x): with B even the total step count stays even, so the two
    # "parallel" axes split cleanly across the two TensorCores.
    params = pltpu.CompilerParams(
        dimension_semantics=("parallel", "parallel"),
        vmem_limit_bytes=_VMEM_LIMIT,
    )
    smem_spec = pl.BlockSpec(memory_space=pltpu.SMEM)

    if HW % LANE == 0:
        # Sublane-dense path: fold spatial axis into (S, 128) (free reshape,
        # same contiguous layout) so vregs are fully packed regardless of C.
        S = HW // LANE
        x1v = x1.reshape(B, C, S, LANE)
        x2v = x2.reshape(B, C, S, LANE)
        gtv = gt_pre.reshape(B, GC, S, LANE)

        s_tile = _pick_rows(S, C, GC, itemsize)
        n_s = pl.cdiv(S, s_tile)

        x_spec = pl.BlockSpec((1, C, s_tile, LANE), lambda b, j: (b, 0, j, 0))
        g_spec = pl.BlockSpec((1, GC, s_tile, LANE), lambda b, j: (b, 0, j, 0))

        out = pl.pallas_call(
            _merge_kernel,
            out_shape=jax.ShapeDtypeStruct((B, C, S, LANE), dtype),
            grid=(B, n_s),
            in_specs=[smem_spec, x_spec, x_spec, g_spec],
            out_specs=x_spec,
            compiler_params=params,
            cost_estimate=cost,
        )(w_arr, x1v, x2v, gtv)
        return out.reshape(B, C, H, W)

    # Fallback: HW not lane-aligned.  No jnp.pad/slice HBM round trip — tile
    # the flat spatial axis with a 128-multiple tile and let Pallas mask the
    # ragged last block (OOB lanes run through sigmoid/mul on undefined data
    # but the corresponding writes are discarded).
    x1v = x1.reshape(B, C, HW)
    x2v = x2.reshape(B, C, HW)
    gtv = gt_pre.reshape(B, GC, HW)

    hw_tile = _pick_cols(HW, C, GC, itemsize)
    n_hw = pl.cdiv(HW, hw_tile)

    x_spec = pl.BlockSpec((1, C, hw_tile), lambda b, j: (b, 0, j))
    g_spec = pl.BlockSpec((1, GC, hw_tile), lambda b, j: (b, 0, j))

    out = pl.pallas_call(
        _merge_kernel,
        out_shape=jax.ShapeDtypeStruct((B, C, HW), dtype),
        grid=(B, n_hw),
        in_specs=[smem_spec, x_spec, x_spec, g_spec],
        out_specs=x_spec,
        compiler_params=params,
        cost_estimate=cost,
    )(w_arr, x1v, x2v, gtv)
    return out.reshape(B, C, H, W)


def merge_ref(x1, x2, gt_pre, w):
    # Pure-JAX reference matching the PyTorch semantics.
    return x1 + x2 + jax.nn.sigmoid(gt_pre) * x2 * w


if __name__ == "__main__":
    key = jax.random.PRNGKey(0)
    k1, k2, k3 = jax.random.split(key, 3)

    B, C, H, W = 2, 4, 16, 16
    x1 = jax.random.normal(k1, (B, C, H, W), dtype=jnp.float32)
    x2 = jax.random.normal(k2, (B, C, H, W), dtype=jnp.float32)
    # gt_pre is a 1-channel pre-mask in doublegeunet; broadcast over C.
    gt_pre = jax.random.normal(k3, (B, 1, H, W), dtype=jnp.float32)
    w = 0.4  # deterministic scalar weight (Merge has no learned params)

    out = jax.block_until_ready(merge_pallas(x1, x2, gt_pre, w))
    ref = merge_ref(x1, x2, gt_pre, w)
    assert out.shape == ref.shape and out.dtype == ref.dtype
    assert jnp.allclose(out, ref, atol=1e-5, rtol=1e-5), "mismatch vs reference"

    # Full-channel gt_pre path (no channel broadcast needed).
    gt_full = jnp.broadcast_to(gt_pre, (B, C, H, W))
    out2 = jax.block_until_ready(merge_pallas(x1, x2, gt_full, w))
    assert jnp.allclose(out2, ref, atol=1e-5, rtol=1e-5), "mismatch (full-C gt)"

    # Non-lane-aligned spatial size exercises the pad-free fallback path.
    Hs, Ws = 10, 10
    y1 = jax.random.normal(k1, (B, C, Hs, Ws), dtype=jnp.float32)
    y2 = jax.random.normal(k2, (B, C, Hs, Ws), dtype=jnp.float32)
    gty = jax.random.normal(k3, (B, 1, Hs, Ws), dtype=jnp.float32)
    out3 = jax.block_until_ready(merge_pallas(y1, y2, gty, w))
    assert jnp.allclose(out3, merge_ref(y1, y2, gty, w), atol=1e-5, rtol=1e-5), \
        "mismatch (non-aligned HW)"

    print("KERNEL_OK")
</pallas_src>

<mosaic_0001>
module attributes {stable_mosaic.version = 11 : i64} {
  func.func @_merge_kernel(%arg0: i32, %arg1: i32, %arg2: memref<1xf32, #tpu.memory_space<smem>>, %arg3: memref<1x4x2x128xf32, #tpu.memory_space<vmem>>, %arg4: memref<1x4x2x128xf32, #tpu.memory_space<vmem>>, %arg5: memref<1x1x2x128xf32, #tpu.memory_space<vmem>>, %arg6: memref<1x4x2x128xf32, #tpu.memory_space<vmem>>) attributes {dimension_semantics = [#tpu.dimension_semantics<parallel>, #tpu.dimension_semantics<parallel>], iteration_bounds = array<i64: 2, 1>, scalar_prefetch = 0 : i64, scratch_operands = 0 : i64, tpu.core_type = #tpu.core_type<tc>, window_params = [{transform_indices = @transform_0, window_bounds = array<i64: 1>}, {transform_indices = @transform_1, window_bounds = array<i64: 1, 4, 2, 128>}, {transform_indices = @transform_2, window_bounds = array<i64: 1, 4, 2, 128>}, {transform_indices = @transform_3, window_bounds = array<i64: 1, 1, 2, 128>}, {transform_indices = @transform_4, window_bounds = array<i64: 1, 4, 2, 128>}]} {
    %c0 = arith.constant 0 : index
    %0 = memref.load %arg2[%c0] : memref<1xf32, #tpu.memory_space<smem>>
    %c0_0 = arith.constant 0 : index
    %c0_1 = arith.constant 0 : index
    %c0_2 = arith.constant 0 : index
    %c0_3 = arith.constant 0 : index
    %1 = vector.load %arg5[%c0_0, %c0_1, %c0_2, %c0_3] : memref<1x1x2x128xf32, #tpu.memory_space<vmem>>, vector<1x1x2x128xf32>
    %2 = arith.negf %1 : vector<1x1x2x128xf32>
    %3 = math.exp %2 : vector<1x1x2x128xf32>
    %cst = arith.constant 1.000000e+00 : f32
    %4 = vector.broadcast %cst : f32 to vector<1x1x2x128xf32>
    %5 = arith.addf %4, %3 : vector<1x1x2x128xf32>
    %6 = arith.divf %4, %5 : vector<1x1x2x128xf32>
    %7 = vector.broadcast %0 : f32 to vector<1x1x2x128xf32>
    %8 = arith.mulf %7, %6 : vector<1x1x2x128xf32>
    %cst_4 = arith.constant 1.000000e+00 : f32
    %9 = vector.broadcast %cst_4 : f32 to vector<1x1x2x128xf32>
    %10 = arith.addf %9, %8 : vector<1x1x2x128xf32>
    %c0_5 = arith.constant 0 : index
    %c0_6 = arith.constant 0 : index
    %c0_7 = arith.constant 0 : index
    %c0_8 = arith.constant 0 : index
    %11 = vector.load %arg3[%c0_5, %c0_6, %c0_7, %c0_8] : memref<1x4x2x128xf32, #tpu.memory_space<vmem>>, vector<1x4x2x128xf32>
    %c0_9 = arith.constant 0 : index
    %c0_10 = arith.constant 0 : index
    %c0_11 = arith.constant 0 : index
    %c0_12 = arith.constant 0 : index
    %12 = vector.load %arg4[%c0_9, %c0_10, %c0_11, %c0_12] : memref<1x4x2x128xf32, #tpu.memory_space<vmem>>, vector<1x4x2x128xf32>
    %13 = vector.broadcast %10 : vector<1x1x2x128xf32> to vector<1x4x2x128xf32>
    %14 = arith.mulf %12, %13 : vector<1x4x2x128xf32>
    %15 = arith.addf %11, %14 : vector<1x4x2x128xf32>
    %c0_13 = arith.constant 0 : index
    %c0_14 = arith.constant 0 : index
    %c0_15 = arith.constant 0 : index
    %c0_16 = arith.constant 0 : index
    %16 = vector.load %arg6[%c0_13, %c0_14, %c0_15, %c0_16] : memref<1x4x2x128xf32, #tpu.memory_space<vmem>>, vector<1x4x2x128xf32>
    tpu.vector_store %arg6[%c0_13, %c0_14, %c0_15, %c0_16], %15 {strides = array<i32>} : memref<1x4x2x128xf32, #tpu.memory_space<vmem>>, vector<1x4x2x128xf32>,
    return
  }
  func.func @transform_0(%arg0: i32, %arg1: i32) -> i32 {
    %c0_i32 = arith.constant 0 : i32
    %c0_i32_0 = arith.constant 0 : i32
    return %c0_i32 : i32
  }
  func.func @transform_1(%arg0: i32, %arg1: i32) -> (i32, i32, i32, i32) {
    %c0_i32 = arith.constant 0 : i32
    %c0_i32_0 = arith.constant 0 : i32
    %c0_i32_1 = arith.constant 0 : i32
    return %arg0, %c0_i32, %arg1, %c0_i32_0 : i32, i32, i32, i32
  }
  func.func @transform_2(%arg0: i32, %arg1: i32) -> (i32, i32, i32, i32) {
    %c0_i32 = arith.constant 0 : i32
    %c0_i32_0 = arith.constant 0 : i32
    %c0_i32_1 = arith.constant 0 : i32
    return %arg0, %c0_i32, %arg1, %c0_i32_0 : i32, i32, i32, i32
  }
  func.func @transform_3(%arg0: i32, %arg1: i32) -> (i32, i32, i32, i32) {
    %c0_i32 = arith.constant 0 : i32
    %c0_i32_0 = arith.constant 0 : i32
    %c0_i32_1 = arith.constant 0 : i32
    return %arg0, %c0_i32, %arg1, %c0_i32_0 : i32, i32, i32, i32
  }
  func.func @transform_4(%arg0: i32, %arg1: i32) -> (i32, i32, i32, i32) {
    %c0_i32 = arith.constant 0 : i32
    %c0_i32_0 = arith.constant 0 : i32
    %c0_i32_1 = arith.constant 0 : i32
    return %arg0, %c0_i32, %arg1, %c0_i32_0 : i32, i32, i32, i32
  }
}

</mosaic_0001>

<llo_original>
// kernel: tpu_custom_call.1
$region0: #{tpu_custom_call.1}
  #allocation0 [shape = 'u32[]', space=smem, size = 0x4, offset = 0x4, fixed_abs, tag = 'smem constant byte address 0x4 - core index']
  #allocation1 [shape = 'u32[144,128]{1,0:T(1,128)}', space=vmem, size = 0x12000, scoped, tag = 'internal scratch']
  #allocation2 [shape = 'f32[1]{0:T(128)S(6)}', space=smem, size = 0x200, scoped, tag = 'scoped memory for tpu_custom_call.1']
  %s0 = inlined_call_operand.<no memory space> [shape: f32[1], index: 0, kind: input, shape index: {}]
  %s1 = inlined_call_operand.hbm [shape: f32[2,4,2,128], index: 1, kind: input, shape index: {}]
  %s2 = inlined_call_operand.hbm [shape: f32[2,4,2,128], index: 2, kind: input, shape index: {}]
  %s3 = inlined_call_operand.vmem [shape: f32[2,1,2,128], index: 3, kind: input, shape index: {}]
  %s4 = inlined_call_operand.hbm [shape: f32[2,4,2,128], index: 4, kind: output, shape index: {}]
  %s5 = sld [smem:[#allocation0]]
  $region57: #{tpu_custom_call.1} parent=0
    _
  %s7 = ssub.s32 1, %s5
  %s8 = scalar_select 0, %s7, %s5
  %9 = sst [smem:[#allocation2]] %s0
  $region1: #{tpu_custom_call.1} parent=0
    #allocation3 [shape = 'u8[8192]{0}', space=vmem, size = 0x2000, scoped, tag = 'input window, operand 1']
    #allocation4 [shape = 's32[2]{0}', space=sflag, size = 0x8, scoped, tag = 'scoped memory for tpu_custom_call.1']
    #allocation5 [shape = 's32[2]{0}', space=sflag, size = 0x8, scoped, tag = 'scoped memory for tpu_custom_call.1']
    #allocation6 [shape = 'u8[8192]{0}', space=vmem, size = 0x2000, scoped, tag = 'input window, operand 2']
    #allocation7 [shape = 's32[2]{0}', space=sflag, size = 0x8, scoped, tag = 'scoped memory for tpu_custom_call.1']
    #allocation8 [shape = 'u8[8192]{0}', space=vmem, size = 0x2000, scoped, tag = 'output window, operand 0']
    %10 = vsyncpa [#allocation4], 0
    %s11 = scalar_lea.sflag [#allocation4], 1
    %12 = vsyncpa %s11, 0
    %13 = vsyncpa [#allocation7], 0
    %s14 = scalar_lea.sflag [#allocation7], 1
    %15 = vsyncpa %s14, 0
    %16 = vsyncpa [#allocation5], 0
    %s17 = scalar_lea.sflag [#allocation5], 1
    %18 = vsyncpa %s17, 0
    loop: start=0, step=1, limit=4
    $region2: #{tpu_custom_call.1} parent=1 // loop_pre_header
      _
    $region3: #{tpu_custom_call.1} parent=1 // loop_header
      %s20 = sphi 0, %s24
      %p21 = scmp.ge.s32.totalorder %s20, 4
      %s27 = sphi 0, %s39
      %s28 = sphi 0, %s35
      %s29 = sphi 0, %s27
      %s30 = sphi 0, %s28
      %s31 = sphi 0, %s29
      %s32 = sphi 0, %s30
      %s40 = sphi 0, %s40
      %s42 = sphi 0, %s40
      %s43 = sphi 0, %s42
      %s57 = sphi 0, %s43
      %s65 = sphi 0, %s67
      %s68 = sphi 0, %s65
      %s69 = sphi 0, %s68
      %s85 = sphi 0, %s69
      %s93 = sphi 0, %s95
      %s96 = sphi 0, %s93
      %s97 = sphi 0, %s96
      %s113 = sphi 0, %s97
      %s121 = sphi 0, %s123
      %s124 = sphi 0, %s121
      %s125 = sphi 0, %s124
      %s141 = sphi 0, %s125
      %s149 = sphi 0, %s151
      %s152 = sphi 0, %s149
      %s153 = sphi 0, %s152
      %s169 = sphi 0, %s153
    $region4: #{tpu_custom_call.1} parent=1 // loop_header_branch
      %23 = sbr.rel (%p21) target = $region8
    $region5: #{tpu_custom_call.1} parent=1 // loop_body
      %s25 = ssub.s32 %s20, 1
      %s26 = ssub.s32 %s20, 2
      %s33 = sadd.s32 1, %s28
      %p34 = scmp.ge.s32.totalorder %s33, 1
      %s35 = scalar_select %p34, 0, %s33
      %s36 = sadd.s32 1, %s27
      %s37 = scalar_select %p34, %s36, %s27
      %p38 = scmp.ge.s32.totalorder %s37, 2
      %s39 = scalar_select %p38, 0, %s37
      %s41 = sadd.s32 %s40, 1
      %p44 = scmp.eq.s32.totalorder %s20, 1
      %p45 = scmp.ne.s32.totalorder %s40, %s42
      %p46 = scmp.eq.s32.totalorder %s20, 0
      %p47 = por %p45, %p46
      %p48 = scmp.ne.s32.totalorder %s40, %s42
      %p49 = scmp.eq.s32.totalorder %s25, 1
      %p50 = por %p48, %p49
      %p51 = scmp.ne.s32.totalorder %s42, %s43
      %p52 = scmp.eq.s32.totalorder %s25, 0
      %p53 = por %p51, %p52
      %p54 = scmp.ne.s32.totalorder %s42, %s43
      %p55 = scmp.eq.s32.totalorder %s26, 1
      %p56 = por %p54, %p55
      %p58 = scmp.ne.s32.totalorder %s43, %s57
      %p59 = scmp.eq.s32.totalorder %s26, 0
      %p60 = por %p58, %p59
      %s61 = ssub.s32 %s27, %s39
      %s62 = ssub.s32 %s28, %s35
      %s63 = sor.u32 %s61, %s62
      %p64 = scmp.eq.s32.totalorder %s63, 0
      %s66 = sadd.s32 %s65, 1
      %s67 = scalar_select %p64, %s65, %s66
      %p70 = pneg %p64
      %p71 = scmp.eq.s32.totalorder %s20, 1
      %p72 = por %p70, %p71
      %p73 = scmp.ne.s32.totalorder %s65, %s68
      %p74 = scmp.eq.s32.totalorder %s20, 0
      %p75 = por %p73, %p74
      %p76 = scmp.ne.s32.totalorder %s65, %s68
      %p77 = scmp.eq.s32.totalorder %s25, 1
      %p78 = por %p76, %p77
      %p79 = scmp.ne.s32.totalorder %s68, %s69
      %p80 = scmp.eq.s32.totalorder %s25, 0
      %p81 = por %p79, %p80
      %p82 = scmp.ne.s32.totalorder %s68, %s69
      %p83 = scmp.eq.s32.totalorder %s26, 1
      %p84 = por %p82, %p83
      %p86 = scmp.ne.s32.totalorder %s69, %s85
      %p87 = scmp.eq.s32.totalorder %s26, 0
      %p88 = por %p86, %p87
      %s89 = ssub.s32 %s27, %s39
      %s90 = ssub.s32 %s28, %s35
      %s91 = sor.u32 %s89, %s90
      %p92 = scmp.eq.s32.totalorder %s91, 0
      %s94 = sadd.s32 %s93, 1
      %s95 = scalar_select %p92, %s93, %s94
      %p98 = pneg %p92
      %p99 = scmp.eq.s32.totalorder %s20, 1
      %p100 = por %p98, %p99
      %p101 = scmp.ne.s32.totalorder %s93, %s96
      %p102 = scmp.eq.s32.totalorder %s20, 0
      %p103 = por %p101, %p102
      %p104 = scmp.ne.s32.totalorder %s93, %s96
      %p105 = scmp.eq.s32.totalorder %s25, 1
      %p106 = por %p104, %p105
      %p107 = scmp.ne.s32.totalorder %s96, %s97
      %p108 = scmp.eq.s32.totalorder %s25, 0
      %p109 = por %p107, %p108
      %p110 = scmp.ne.s32.totalorder %s96, %s97
      %p111 = scmp.eq.s32.totalorder %s26, 1
      %p112 = por %p110, %p111
      %p114 = scmp.ne.s32.totalorder %s97, %s113
      %p115 = scmp.eq.s32.totalorder %s26, 0
      %p116 = por %p114, %p115
      %s117 = ssub.s32 %s27, %s39
      %s118 = ssub.s32 %s28, %s35
      %s119 = sor.u32 %s117, %s118
      %p120 = scmp.eq.s32.totalorder %s119, 0
      %s122 = sadd.s32 %s121, 1
      %s123 = scalar_select %p120, %s121, %s122
      %p126 = pneg %p120
      %p127 = scmp.eq.s32.totalorder %s20, 1
      %p128 = por %p126, %p127
      %p129 = scmp.ne.s32.totalorder %s121, %s124
      %p130 = scmp.eq.s32.totalorder %s20, 0
      %p131 = por %p129, %p130
      %p132 = scmp.ne.s32.totalorder %s121, %s124
      %p133 = scmp.eq.s32.totalorder %s25, 1
      %p134 = por %p132, %p133
      %p135 = scmp.ne.s32.totalorder %s124, %s125
      %p136 = scmp.eq.s32.totalorder %s25, 0
      %p137 = por %p135, %p136
      %p138 = scmp.ne.s32.totalorder %s124, %s125
      %p139 = scmp.eq.s32.totalorder %s26, 1
      %p140 = por %p138, %p139
      %p142 = scmp.ne.s32.totalorder %s125, %s141
      %p143 = scmp.eq.s32.totalorder %s26, 0
      %p144 = por %p142, %p143
      %s145 = ssub.s32 %s27, %s39
      %s146 = ssub.s32 %s28, %s35
      %s147 = sor.u32 %s145, %s146
      %p148 = scmp.eq.s32.totalorder %s147, 0
      %s150 = sadd.s32 %s149, 1
      %s151 = scalar_select %p148, %s149, %s150
      %p154 = pneg %p148
      %p155 = scmp.eq.s32.totalorder %s20, 1
      %p156 = por %p154, %p155
      %p157 = scmp.ne.s32.totalorder %s149, %s152
      %p158 = scmp.eq.s32.totalorder %s20, 0
      %p159 = por %p157, %p158
      %p160 = scmp.ne.s32.totalorder %s149, %s152
      %p161 = scmp.eq.s32.totalorder %s25, 1
      %p162 = por %p160, %p161
      %p163 = scmp.ne.s32.totalorder %s152, %s153
      %p164 = scmp.eq.s32.totalorder %s25, 0
      %p165 = por %p163, %p164
      %p166 = scmp.ne.s32.totalorder %s152, %s153
      %p167 = scmp.eq.s32.totalorder %s26, 1
      %p168 = por %p166, %p167
      %p170 = scmp.ne.s32.totalorder %s153, %s169
      %p171 = scmp.eq.s32.totalorder %s26, 0
      %p172 = por %p170, %p171
      %p173 = scmp.le.s32.totalorder 1, %s20
      %p174 = scmp.lt.s32.totalorder %s20, 3
      %p175 = pnand %p173, %p174
      %p176 = pneg %p175
      // Predicated region
      $region9: #{tpu_custom_call.1} parent=5 // pred_check
        _
      $region10: #{tpu_custom_call.1} parent=5 // pred_check_branch
        %178 = sbr.rel (%p175) target = $region12
      $region11: #{tpu_custom_call.1} parent=5 // pred_region
        %s179 = ssub.s32 %s20, 1
        // Predicated region
        $region13: #{tpu_custom_call.1} parent=11 // pred_check
          %p180 = pneg %p53
        $region14: #{tpu_custom_call.1} parent=11 // pred_check_branch
          %182 = sbr.rel (%p180) target = $region16
        $region15: #{tpu_custom_call.1} parent=11 // pred_region
          _
        $region16: #{tpu_custom_call.1} parent=11 // pred_fallthru
          _
      $region12: #{tpu_custom_call.1} parent=5 // pred_fallthru
        _
      %p183 = scmp.lt.s32.totalorder %s20, 2
      // Predicated region
      $region17: #{tpu_custom_call.1} parent=5 // pred_check
        %p184 = pneg %p183
      $region18: #{tpu_custom_call.1} parent=5 // pred_check_branch
        %186 = sbr.rel (%p184) target = $region20
      $region19: #{tpu_custom_call.1} parent=5 // pred_region
        // Predicated region
        $region21: #{tpu_custom_call.1} parent=19 // pred_check
          %p187 = pneg %p75
        $region22: #{tpu_custom_call.1} parent=19 // pred_check_branch
          %189 = sbr.rel (%p187) target = $region24
        $region23: #{tpu_custom_call.1} parent=19 // pred_region
          %s190 = sand.u32 %s65, 1
          %s191 = scalar_lea.sflag [#allocation4], %s190
          %s192 = sand.u32 %s65, 1
          %s193 = smul.addr %s192, 8
          %s194 = scalar_lea.vmem [#allocation3], %s193
          %s196 = ssub.s32 128, 128
          %197 = vsyncadd %s191, %s196
          %s198 = smul.addr %s27, 4
          %s199 = sadd.s32 %s28, %s198
          %s200 = smul.addr %s199, 32
          %s201 = scalar_lea.hbm %s1, %s200
          %s202 = sshll.u32 %s194, 4
          %s203 = int_to_ptr.vmem [resolvable:$true] %s202
          %208 = dma.hbm_to_vmem [thread:$0]  %s201, 128, %s203, %s191, 32, 32, 2
        $region24: #{tpu_custom_call.1} parent=19 // pred_fallthru
          _
        // Predicated region
        $region25: #{tpu_custom_call.1} parent=19 // pred_check
          %p209 = pneg %p103
        $region26: #{tpu_custom_call.1} parent=19 // pred_check_branch
          %211 = sbr.rel (%p209) target = $region28
        $region27: #{tpu_custom_call.1} parent=19 // pred_region
          %s212 = sand.u32 %s93, 1
          %s213 = scalar_lea.sflag [#allocation7], %s212
          %s214 = sand.u32 %s93, 1
          %s215 = smul.addr %s214, 8
          %s216 = scalar_lea.vmem [#allocation6], %s215
          %s218 = ssub.s32 128, 128
          %219 = vsyncadd %s213, %s218
          %s220 = smul.addr %s27, 4
          %s221 = sadd.s32 %s28, %s220
          %s222 = smul.addr %s221, 32
          %s223 = scalar_lea.hbm %s2, %s222
          %s224 = sshll.u32 %s216, 4
          %s225 = int_to_ptr.vmem [resolvable:$true] %s224
          %230 = dma.hbm_to_vmem [thread:$0]  %s223, 128, %s225, %s213, 32, 32, 2
        $region28: #{tpu_custom_call.1} parent=19 // pred_fallthru
          _
        // Predicated region
        $region29: #{tpu_custom_call.1} parent=19 // pred_check
          %p231 = pneg %p131
        $region30: #{tpu_custom_call.1} parent=19 // pred_check_branch
          %233 = sbr.rel (%p231) target = $region32
        $region31: #{tpu_custom_call.1} parent=19 // pred_region
          %p234 = scmp.lt.s32.totalorder %s27, 1
          %s235 = scalar_select %p234, %s27, 1
          %p236 = scmp.lt.s32.totalorder %s28, 0
          %s237 = scalar_select %p236, %s28, 0
          %s238 = sadd.s32 %s237, %s235
          %s239 = smul.addr %s238, 2
          %s240 = scalar_lea.vmem %s3, %s239
        $region32: #{tpu_custom_call.1} parent=19 // pred_fallthru
          _
      $region20: #{tpu_custom_call.1} parent=5 // pred_fallthru
        _
      %p241 = scmp.le.s32.totalorder 1, %s20
      %p242 = scmp.lt.s32.totalorder %s20, 3
      %p243 = pnand %p241, %p242
      %p244 = pneg %p243
      // Predicated region
      $region33: #{tpu_custom_call.1} parent=5 // pred_check
        _
      $region34: #{tpu_custom_call.1} parent=5 // pred_check_branch
        %246 = sbr.rel (%p243) target = $region36
      $region35: #{tpu_custom_call.1} parent=5 // pred_region
        %s247 = ssub.s32 %s20, 1
        %s248 = sand.u32 %s68, 1
        %s249 = scalar_lea.sflag [#allocation4], %s248
        %s250 = sand.u32 %s68, 1
        %s251 = smul.addr %s250, 8
        %s252 = scalar_lea.vmem [#allocation3], %s251
        // Predicated region
        $region37: #{tpu_custom_call.1} parent=35 // pred_check
          %p253 = pneg %p81
        $region38: #{tpu_custom_call.1} parent=35 // pred_check_branch
          %255 = sbr.rel (%p253) target = $region40
        $region39: #{tpu_custom_call.1} parent=35 // pred_region
          %256 = dma.done %s249, 128
        $region40: #{tpu_custom_call.1} parent=35 // pred_fallthru
          _
        %s257 = sand.u32 %s96, 1
        %s258 = scalar_lea.sflag [#allocation7], %s257
        %s259 = sand.u32 %s96, 1
        %s260 = smul.addr %s259, 8
        %s261 = scalar_lea.vmem [#allocation6], %s260
        // Predicated region
        $region41: #{tpu_custom_call.1} parent=35 // pred_check
          %p262 = pneg %p109
        $region42: #{tpu_custom_call.1} parent=35 // pred_check_branch
          %264 = sbr.rel (%p262) target = $region44
        $region43: #{tpu_custom_call.1} parent=35 // pred_region
          %265 = dma.done %s258, 128
        $region44: #{tpu_custom_call.1} parent=35 // pred_fallthru
          _
        %p266 = pneg %p53
        %p267 = pneg %p50
        %s268 = sand.u32 %s68, 1
        %s269 = scalar_lea.sflag [#allocation4], %s268
        %s270 = sand.u32 %s68, 1
        %s271 = smul.addr %s270, 8
        %s272 = scalar_lea.vmem [#allocation3], %s271
        %p273 = pneg %p81
        %p274 = pneg %p78
        %s275 = sand.u32 %s96, 1
        %s276 = scalar_lea.sflag [#allocation7], %s275
        %s277 = sand.u32 %s96, 1
        %s278 = smul.addr %s277, 8
        %s279 = scalar_lea.vmem [#allocation6], %s278
        %p280 = pneg %p109
        %p281 = pneg %p106
        %p282 = scmp.lt.s32.totalorder %s29, 1
        %s283 = scalar_select %p282, %s29, 1
        %p284 = scmp.lt.s32.totalorder %s30, 0
        %s285 = scalar_select %p284, %s30, 0
        %s286 = sadd.s32 %s285, %s283
        %s287 = smul.addr %s286, 2
        %s288 = scalar_lea.vmem %s3, %s287
        %p289 = pneg %p137
        %p290 = pneg %p134
        %p291 = pneg %p165
        %p292 = pneg %p162
        %s293 = sand.u32 %s152, 1
        %s294 = scalar_lea.sflag [#allocation5], %s293
        %s295 = sand.u32 %s152, 1
        %s296 = smul.addr %s295, 8
        %s297 = scalar_lea.vmem [#allocation8], %s296
        %p298 = scmp.lt.s32.totalorder %s29, 1
        %s299 = scalar_select %p298, %s29, 1
        %p300 = scmp.lt.s32.totalorder %s30, 0
        %s301 = scalar_select %p300, %s30, 0
        %s302 = sadd.s32 %s301, %s299
        %s303 = smul.addr %s302, 2
        %s304 = scalar_lea.vmem %s3, %s303
        %s305 = sld [smem:[#allocation2]]
        %v306 = vld [vmem:[%s304] sm:$0x3]
        %v307 = vxor.u32 %v306, 2147483648
        %v308 = vmul.f32 %v307, 1.442695
        %v309 = vpow.pop %v308
        %v310 = vadd.f32 %v309, 1.0
        %v311 = vrcp.pop %v310
        %v312 = vmul.f32 1.0, %v311
        %v313 = vstv %s305
        %v314 = vmul.f32 %v313, %v312
        %v315 = vadd.f32 %v314, 1.0
        %v316 = vld [vmem:[%s252] sm:$0x3]
        %v317 = vld [vmem:[%s252 + $0x2] sm:$0x3]
        %v318 = vld [vmem:[%s252 + $0x4] sm:$0x3]
        %v319 = vld [vmem:[%s252 + $0x6] sm:$0x3]
        %v320 = vld [vmem:[%s261] sm:$0x3]
        %v321 = vld [vmem:[%s261 + $0x2] sm:$0x3]
        %v322 = vld [vmem:[%s261 + $0x4] sm:$0x3]
        %v323 = vld [vmem:[%s261 + $0x6] sm:$0x3]
        %v324 = vmul.f32 %v320, %v315
        %v325 = vmul.f32 %v321, %v315
        %v326 = vmul.f32 %v322, %v315
        %v327 = vmul.f32 %v323, %v315
        %v328 = vadd.f32 %v316, %v324
        %v329 = vadd.f32 %v317, %v325
        %v330 = vadd.f32 %v318, %v326
        %v331 = vadd.f32 %v319, %v327
        %332 = vst [vmem:[%s297] sm:$0x3] %v328
        %333 = vst [vmem:[%s297 + $0x2] sm:$0x3] %v329
        %334 = vst [vmem:[%s297 + $0x4] sm:$0x3] %v330
        %335 = vst [vmem:[%s297 + $0x6] sm:$0x3] %v331
        %s336 = sand.u32 %s152, 1
        %s337 = scalar_lea.sflag [#allocation5], %s336
        %s338 = sand.u32 %s152, 1
        %s339 = smul.addr %s338, 8
        %s340 = scalar_lea.vmem [#allocation8], %s339
        // Predicated region
        $region45: #{tpu_custom_call.1} parent=35 // pred_check
          %p341 = pneg %p162
        $region46: #{tpu_custom_call.1} parent=35 // pred_check_branch
          %343 = sbr.rel (%p341) target = $region48
        $region47: #{tpu_custom_call.1} parent=35 // pred_region
          %s345 = ssub.s32 128, 128
          %346 = vsyncadd %s337, %s345
          %s347 = smul.addr %s29, 4
          %s348 = sadd.s32 %s30, %s347
          %s349 = smul.addr %s348, 32
          %s350 = scalar_lea.hbm %s4, %s349
          %s351 = sshll.u32 %s340, 4
          %s352 = int_to_ptr.vmem [resolvable:$true] %s351
          %357 = dma.vmem_to_hbm [thread:$0]  %s352, 128, %s350, %s337, 32, 32, 2
        $region48: #{tpu_custom_call.1} parent=35 // pred_fallthru
          _
      $region36: #{tpu_custom_call.1} parent=5 // pred_fallthru
        _
      %p358 = scmp.le.s32.totalorder 2, %s20
      // Predicated region
      $region49: #{tpu_custom_call.1} parent=5 // pred_check
        %p359 = pneg %p358
      $region50: #{tpu_custom_call.1} parent=5 // pred_check_branch
        %361 = sbr.rel (%p359) target = $region52
      $region51: #{tpu_custom_call.1} parent=5 // pred_region
        %s362 = ssub.s32 %s20, 2
        // Predicated region
        $region53: #{tpu_custom_call.1} parent=51 // pred_check
          %p363 = pneg %p168
        $region54: #{tpu_custom_call.1} parent=51 // pred_check_branch
          %365 = sbr.rel (%p363) target = $region56
        $region55: #{tpu_custom_call.1} parent=51 // pred_region
          %s366 = sand.u32 %s153, 1
          %s367 = scalar_lea.sflag [#allocation5], %s366
          %s368 = sand.u32 %s153, 1
          %s369 = smul.addr %s368, 8
          %s370 = scalar_lea.vmem [#allocation8], %s369
          %371 = dma.done %s367, 128
        $region56: #{tpu_custom_call.1} parent=51 // pred_fallthru
          _
      $region52: #{tpu_custom_call.1} parent=5 // pred_fallthru
        _
    $region6: #{tpu_custom_call.1} parent=1 // loop_footer
      %s24 = sadd.s32 1, %s20
    $region7: #{tpu_custom_call.1} parent=1 // loop_footer_branch
      %19 = sbr.rel target = $region3
    $region8: #{tpu_custom_call.1} parent=1 // loop_exit
      _
    %372 = vsyncpa [#allocation4], 1
    %s373 = scalar_lea.sflag [#allocation4], 1
    %374 = vsyncpa %s373, 1
    %375 = vsyncpa [#allocation7], 1
    %s376 = scalar_lea.sflag [#allocation7], 1
    %377 = vsyncpa %s376, 1
    %378 = vsyncpa [#allocation5], 1
    %s379 = scalar_lea.sflag [#allocation5], 1
    %380 = vsyncpa %s379, 1

</llo_original>
